<compile_context>
chip_gen: v7x
topology: tpu7x:2x2x1
jax: 0.10.0
libtpu: 0.0.40
codegen_flags: <defaults>
</compile_context>

<pallas_src>
import functools

import jax
import jax.numpy as jnp
from jax.experimental import pallas as pl
from jax.experimental.pallas import tpu as pltpu

_LANES = 128
_NCORES = 2  # per-chip TensorCores to split over (v7x); no-op on 1-TC chips


def _round_up(x: int, m: int) -> int:
    return ((x + m - 1) // m) * m


# ---------------------------------------------------------------------------
# Lane-dense kernel: preds viewed as (M, 128) with M = B*T*Q // 128.
# Requires 128 % Q == 0 and (B*T*Q) % 128 == 0.
# ---------------------------------------------------------------------------
def _lane_dense_kernel(*, q, tile_rows, m_rows, num_tiles, tiles_per_core,
                       inv_n):
    s = q - 1
    w = _LANES - s
    needs_row_mask = (m_rows % tile_rows) != 0
    has_phantom = (num_tiles != _NCORES * tiles_per_core)

    def kernel(x_ref, o_ref, acc_ref):
        c = pl.program_id(0)           # core index      ("parallel")
        i = pl.program_id(1)           # tile within core ("arbitrary")
        g = c * tiles_per_core + i     # global row-tile index

        @pl.when(i == 0)
        def _init():
            acc_ref[...] = jnp.zeros_like(acc_ref)

        def _accumulate():
            x = x_ref[...].astype(jnp.float32)        # (tile_rows, 128)
            # Channel 0 of a sample sits at lane l (l % Q == 0); channel Q-1
            # sits at lane l + s of the *same* vreg row (since 128 % Q == 0).
            a = x[:, :w]
            b = x[:, s:]
            d = jnp.abs(a - b)                        # valid at lanes % Q == 0
            if needs_row_mask:
                row = g * tile_rows + jax.lax.broadcasted_iota(
                    jnp.int32, (tile_rows, w), 0)
                d = jnp.where(row < m_rows, d, 0.0)
            acc_ref[...] += d                         # elementwise, no reduce

        if has_phantom:
            # Grid padded to a rectangle: phantom tiles skip accumulation.
            pl.when(g < num_tiles)(_accumulate)
        else:
            _accumulate()

        @pl.when(i == tiles_per_core - 1)
        def _finalize():
            lane = jax.lax.broadcasted_iota(jnp.int32, (tile_rows, w), 1)
            kept = (lane & (q - 1)) == 0              # q is a power of 2 here
            partial = jnp.sum(jnp.where(kept, acc_ref[...], 0.0)) * inv_n
            o_ref[...] = jnp.full(o_ref.shape, partial, jnp.float32)

    return kernel


def _mil_lane_dense(preds, n, q, tile_rows):
    m_rows = (n * q) // _LANES
    x = preds.reshape(m_rows, _LANES)                 # free view (contiguous)

    tile_rows = _round_up(min(tile_rows, _round_up(m_rows, 8)), 8)
    num_tiles = pl.cdiv(m_rows, tile_rows)
    tiles_per_core = pl.cdiv(num_tiles, _NCORES)

    if num_tiles == _NCORES * tiles_per_core:
        x_index = lambda c, i: (c * tiles_per_core + i, 0)
    else:
        # Phantom tiles re-read the last real tile (in-bounds DMA) and skip
        # accumulation inside the kernel.
        x_index = lambda c, i: (
            jnp.minimum(c * tiles_per_core + i, num_tiles - 1), 0)

    kernel = _lane_dense_kernel(
        q=q, tile_rows=tile_rows, m_rows=m_rows, num_tiles=num_tiles,
        tiles_per_core=tiles_per_core, inv_n=1.0 / float(n))

    out = pl.pallas_call(
        kernel,
        out_shape=jax.ShapeDtypeStruct((_NCORES, 8, _LANES), jnp.float32),
        grid_spec=pltpu.PrefetchScalarGridSpec(
            num_scalar_prefetch=0,
            grid=(_NCORES, tiles_per_core),
            in_specs=[pl.BlockSpec((tile_rows, _LANES), x_index)],
            out_specs=pl.BlockSpec((1, 8, _LANES), lambda c, i: (c, 0, 0)),
            scratch_shapes=[pltpu.VMEM((tile_rows, w_acc), jnp.float32)
                            for w_acc in (_LANES - (q - 1),)],
        ),
        compiler_params=pltpu.CompilerParams(
            dimension_semantics=("parallel", "arbitrary"),
        ),
    )(x)
    # One partial mean per core (each already scaled by 1/n); sum them.
    return jnp.sum(out[:, 0, 0])


# ---------------------------------------------------------------------------
# General-Q kernel: preds viewed as (B*T, Q); last block dim == full array dim.
# ---------------------------------------------------------------------------
def _general_kernel(*, q, tile_rows, n_rows, inv_n):
    needs_row_mask = (n_rows % tile_rows) != 0

    def kernel(x_ref, o_ref, acc_ref):
        i = pl.program_id(0)

        @pl.when(i == 0)
        def _init():
            acc_ref[...] = jnp.zeros_like(acc_ref)

        x = x_ref[...]
        a = x[:, 0:1].astype(jnp.float32)
        b = x[:, q - 1:q].astype(jnp.float32)
        d = jnp.abs(a - b)                            # (tile_rows, 1)
        if needs_row_mask:
            row = i * tile_rows + jax.lax.broadcasted_iota(
                jnp.int32, (tile_rows, 1), 0)
            d = jnp.where(row < n_rows, d, 0.0)
        acc_ref[...] += d

        @pl.when(i == pl.num_programs(0) - 1)
        def _finalize():
            o_ref[0, 0] = jnp.sum(acc_ref[...]) * inv_n

    return kernel


def _mil_general(preds, n, q, tile_rows):
    x = preds.reshape(n, q)                           # free view
    tile_rows = _round_up(min(tile_rows, _round_up(n, 8)), 8)
    num_tiles = pl.cdiv(n, tile_rows)
    kernel = _general_kernel(q=q, tile_rows=tile_rows, n_rows=n,
                             inv_n=1.0 / float(n))
    # TODO(synk): mirror the dual-core split on this general-Q path if needed.
    out = pl.pallas_call(
        kernel,
        out_shape=jax.ShapeDtypeStruct((1, 1), jnp.float32),
        grid_spec=pltpu.PrefetchScalarGridSpec(
            num_scalar_prefetch=0,
            grid=(num_tiles,),
            in_specs=[pl.BlockSpec((tile_rows, q), lambda i: (i, 0))],
            out_specs=pl.BlockSpec((1, 1), lambda i: (0, 0)),
            scratch_shapes=[pltpu.VMEM((tile_rows, 1), jnp.float32)],
        ),
        compiler_params=pltpu.CompilerParams(
            dimension_semantics=("arbitrary",),
        ),
    )(x)
    return out[0, 0]


# ---------------------------------------------------------------------------
# Public entry point (== MIL(quantiles).forward(preds, target)).
# ---------------------------------------------------------------------------
@functools.partial(
    jax.jit, static_argnames=("tile_rows", "min_pallas_elems", "force_pallas"))
def mil_forward(preds, target=None, quantiles=None, *, tile_rows: int = 2048,
                min_pallas_elems: int = 65536, force_pallas: bool = False):
    """JAX/Pallas equivalent of MIL(quantiles).forward(preds, target)."""
    del target, quantiles                             # unused, as in PyTorch
    b, t, q = preds.shape
    n = b * t

    if (not force_pallas) and n < min_pallas_elems:
        # Launch + pipeline prologue dominate for loss-sized tensors; fused
        # XLA is strictly faster there.
        p0 = preds[:, :, 0].astype(jnp.float32)
        pq = preds[:, :, q - 1].astype(jnp.float32)
        return jnp.mean(jnp.abs(p0 - pq))

    if (_LANES % q == 0) and ((n * q) % _LANES == 0):
        return _mil_lane_dense(preds, n, q, tile_rows)
    return _mil_general(preds, n, q, tile_rows)


if __name__ == "__main__":
    key = jax.random.PRNGKey(0)
    k1, k2, k3, k4 = jax.random.split(key, 4)

    quantiles = [0.1, 0.25, 0.5, 0.75]                # Q = 4 (no learned params)

    def ref(p):
        p32 = p.astype(jnp.float32)
        return jnp.mean(jnp.abs(p32[:, :, 0] - p32[:, :, -1]))

    # 1) Tiny input forced through the lane-dense Pallas kernel
    #    (single real tile; core 1 handles a phantom tile -> clamp + skip).
    preds = jax.random.normal(k1, (2, 128, 4), dtype=jnp.float32)
    target = jax.random.normal(k1, (2, 128), dtype=jnp.float32)   # unused
    out = jax.block_until_ready(
        mil_forward(preds, target, quantiles, force_pallas=True))
    assert jnp.allclose(out, ref(preds), atol=1e-5, rtol=1e-5), (out, ref(preds))

    # 2) Multi-tile lane-dense path across both cores (grid (2, 4)), ragged
    #    last tile exercising the in-kernel row mask.
    preds2 = jax.random.normal(k2, (4, 1000, 4), dtype=jnp.float32)
    out2 = jax.block_until_ready(
        mil_forward(preds2, None, quantiles, tile_rows=16, force_pallas=True))
    assert jnp.allclose(out2, ref(preds2), atol=1e-5, rtol=1e-5), (out2, ref(preds2))

    # 3) bf16 preds stay bf16 into the kernel; upcast to f32 happens in-kernel.
    preds3 = jax.random.normal(k3, (4, 1000, 4), dtype=jnp.bfloat16)
    out3 = jax.block_until_ready(
        mil_forward(preds3, None, quantiles, tile_rows=16, force_pallas=True))
    assert jnp.allclose(out3, ref(preds3), atol=1e-4, rtol=1e-4), (out3, ref(preds3))

    # 4) General-Q kernel (Q=3 does not divide 128), multi-tile, ragged tail.
    preds4 = jax.random.normal(k4, (2, 240, 3), dtype=jnp.float32)
    out4 = jax.block_until_ready(
        mil_forward(preds4, None, [0.1, 0.5, 0.9], tile_rows=64,
                    force_pallas=True))
    assert jnp.allclose(out4, ref(preds4), atol=1e-5, rtol=1e-5), (out4, ref(preds4))

    # 5) Default dispatch: small inputs take the fused-XLA fallback.
    out5 = jax.block_until_ready(mil_forward(preds, target, quantiles))
    assert jnp.allclose(out5, ref(preds), atol=1e-6, rtol=1e-6), (out5, ref(preds))

    print("KERNEL_OK")
</pallas_src>

<mosaic_0001>
module attributes {stable_mosaic.version = 11 : i64} {
  func.func @kernel(%arg0: i32, %arg1: i32, %arg2: memref<8x128xf32, #tpu.memory_space<vmem>>, %arg3: memref<1x8x128xf32, #tpu.memory_space<vmem>>, %arg4: memref<8x125xf32, #tpu.memory_space<vmem>>) attributes {dimension_semantics = [#tpu.dimension_semantics<parallel>, #tpu.dimension_semantics<arbitrary>], iteration_bounds = array<i64: 2, 1>, scalar_prefetch = 0 : i64, scratch_operands = 1 : i64, tpu.core_type = #tpu.core_type<tc>, window_params = [{transform_indices = @transform_0, window_bounds = array<i64: 8, 128>}, {transform_indices = @transform_1, window_bounds = array<i64: 1, 8, 128>}]} {
    %c1_i32 = arith.constant 1 : i32
    %0 = arith.muli %arg0, %c1_i32 : i32
    %1 = arith.addi %0, %arg1 : i32
    %c0_i32 = arith.constant 0 : i32
    %2 = arith.cmpi eq, %arg1, %c0_i32 : i32
    %3 = arith.extui %2 : i1 to i32
    %c0_i32_0 = arith.constant 0 : i32
    %4 = arith.cmpi ne, %3, %c0_i32_0 : i32
    scf.if %4 {
      %cst = arith.constant 0.000000e+00 : f32
      %11 = vector.broadcast %cst : f32 to vector<8x125xf32>
      %c0 = arith.constant 0 : index
      %c0_5 = arith.constant 0 : index
      %12 = vector.load %arg4[%c0, %c0_5] : memref<8x125xf32, #tpu.memory_space<vmem>>, vector<8x125xf32>
      tpu.vector_store %arg4[%c0, %c0_5], %11 {strides = array<i32>} : memref<8x125xf32, #tpu.memory_space<vmem>>, vector<8x125xf32>,
    } else {
    }
    %c1_i32_1 = arith.constant 1 : i32
    %5 = arith.cmpi slt, %1, %c1_i32_1 : i32
    %6 = arith.extui %5 : i1 to i32
    %c0_i32_2 = arith.constant 0 : i32
    %7 = arith.cmpi ne, %6, %c0_i32_2 : i32
    scf.if %7 {
      %c0 = arith.constant 0 : index
      %c0_5 = arith.constant 0 : index
      %11 = vector.load %arg2[%c0, %c0_5] : memref<8x128xf32, #tpu.memory_space<vmem>>, vector<8x128xf32>
      %12 = vector.extract_strided_slice %11 {offsets = [0, 0], sizes = [8, 125], strides = [1, 1]} : vector<8x128xf32> to vector<8x125xf32>
      %13 = vector.extract_strided_slice %11 {offsets = [0, 3], sizes = [8, 125], strides = [1, 1]} : vector<8x128xf32> to vector<8x125xf32>
      %14 = arith.subf %12, %13 : vector<8x125xf32>
      %15 = math.absf %14 : vector<8x125xf32>
      %c0_6 = arith.constant 0 : index
      %c0_7 = arith.constant 0 : index
      %16 = vector.load %arg4[%c0_6, %c0_7] : memref<8x125xf32, #tpu.memory_space<vmem>>, vector<8x125xf32>
      %17 = arith.addf %16, %15 : vector<8x125xf32>
      %c0_8 = arith.constant 0 : index
      %c0_9 = arith.constant 0 : index
      %18 = vector.load %arg4[%c0_8, %c0_9] : memref<8x125xf32, #tpu.memory_space<vmem>>, vector<8x125xf32>
      tpu.vector_store %arg4[%c0_8, %c0_9], %17 {strides = array<i32>} : memref<8x125xf32, #tpu.memory_space<vmem>>, vector<8x125xf32>,
    } else {
    }
    %c0_i32_3 = arith.constant 0 : i32
    %8 = arith.cmpi eq, %arg1, %c0_i32_3 : i32
    %9 = arith.extui %8 : i1 to i32
    %c0_i32_4 = arith.constant 0 : i32
    %10 = arith.cmpi ne, %9, %c0_i32_4 : i32
    scf.if %10 {
      %11 = tpu.iota {dimensions = array<i32: 1>} : vector<8x125xi32>
      %c3_i32 = arith.constant 3 : i32
      %12 = vector.broadcast %c3_i32 : i32 to vector<8x125xi32>
      %13 = arith.andi %11, %12 : vector<8x125xi32>
      %c0_i32_5 = arith.constant 0 : i32
      %14 = vector.broadcast %c0_i32_5 : i32 to vector<8x125xi32>
      %15 = arith.cmpi eq, %13, %14 : vector<8x125xi32>
      %c0 = arith.constant 0 : index
      %c0_6 = arith.constant 0 : index
      %16 = vector.load %arg4[%c0, %c0_6] : memref<8x125xf32, #tpu.memory_space<vmem>>, vector<8x125xf32>
      %cst = arith.constant 0.000000e+00 : f32
      %17 = vector.broadcast %cst : f32 to vector<8x125xf32>
      %18 = arith.select %15, %16, %17 : vector<8x125xi1>, vector<8x125xf32>
      %19 = vector.shape_cast %18 : vector<8x125xf32> to vector<1x8x125xf32>
      %cst_7 = arith.constant dense<0.000000e+00> : vector<1xf32>
      %20 = vector.multi_reduction <add>, %19, %cst_7 [1, 2] : vector<1x8x125xf32> to vector<1xf32>
      %21 = vector.shape_cast %20 : vector<1xf32> to vector<1x1x1xf32>
      %22 = vector.extract %21[0, 0, 0] : f32 from vector<1x1x1xf32>
      %cst_8 = arith.constant 3.906250e-03 : f32
      %23 = arith.mulf %22, %cst_8 : f32
      %24 = vector.broadcast %23 : f32 to vector<1x8x128xf32>
      %c0_9 = arith.constant 0 : index
      %c0_10 = arith.constant 0 : index
      %c0_11 = arith.constant 0 : index
      %25 = vector.load %arg3[%c0_9, %c0_10, %c0_11] : memref<1x8x128xf32, #tpu.memory_space<vmem>>, vector<1x8x128xf32>
      tpu.vector_store %arg3[%c0_9, %c0_10, %c0_11], %24 {strides = array<i32>} : memref<1x8x128xf32, #tpu.memory_space<vmem>>, vector<1x8x128xf32>,
    } else {
    }
    return
  }
  func.func @transform_0(%arg0: i32, %arg1: i32) -> (i32, i32) {
    %c1_i32 = arith.constant 1 : i32
    %0 = arith.muli %arg0, %c1_i32 : i32
    %1 = arith.addi %0, %arg1 : i32
    %c0_i32 = arith.constant 0 : i32
    %2 = arith.minsi %1, %c0_i32 : i32
    %c0_i32_0 = arith.constant 0 : i32
    %c0_i32_1 = arith.constant 0 : i32
    return %2, %c0_i32_0 : i32, i32
  }
  func.func @transform_1(%arg0: i32, %arg1: i32) -> (i32, i32, i32) {
    %c0_i32 = arith.constant 0 : i32
    %c0_i32_0 = arith.constant 0 : i32
    %c0_i32_1 = arith.constant 0 : i32
    return %arg0, %c0_i32, %c0_i32_0 : i32, i32, i32
  }
}

</mosaic_0001>

<llo_original>
// kernel: mil_forward.1
$region0: #{mil_forward.1}
  #allocation0 [shape = 'u32[]', space=smem, size = 0x4, offset = 0x4, fixed_abs, tag = 'smem constant byte address 0x4 - core index']
  #allocation1 [shape = 'u32[144,128]{1,0:T(1,128)}', space=vmem, size = 0x12000, scoped, tag = 'internal scratch']
  #allocation2 [shape = 'f32[8,125]{1,0:T(8,128)}', space=vmem, size = 0x1000, scoped, tag = 'scratch operand']
  %s0 = inlined_call_operand.vmem [shape: f32[8,128], index: 0, kind: input, shape index: {}]
  %s1 = inlined_call_operand.vmem [shape: f32[2,8,128], index: 1, kind: output, shape index: {}]
  %s2 = sld [smem:[#allocation0]]
  $region49: #{mil_forward.1} parent=0
    _
  %s4 = ssub.s32 1, %s2
  %s5 = scalar_select 0, %s4, %s2
  loop: start=0, step=1, limit=4
  $region2: #{mil_forward.1} parent=0 // loop_pre_header
    _
  $region3: #{mil_forward.1} parent=0 // loop_header
    %s7 = sphi 0, %s11
    %p8 = scmp.ge.s32.totalorder %s7, 4
    %s14 = sphi 0, %s26
    %s15 = sphi 0, %s22
    %s16 = sphi 0, %s14
    %s17 = sphi 0, %s15
    %s18 = sphi 0, %s16
    %s19 = sphi 0, %s17
    %s35 = sphi 0, %s37
    %s38 = sphi 0, %s35
    %s39 = sphi 0, %s38
    %s55 = sphi 0, %s39
    %s61 = sphi 0, %s63
    %s64 = sphi 0, %s61
    %s65 = sphi 0, %s64
    %s81 = sphi 0, %s65
  $region4: #{mil_forward.1} parent=0 // loop_header_branch
    %10 = sbr.rel (%p8) target = $region8
  $region5: #{mil_forward.1} parent=0 // loop_body
    %s12 = ssub.s32 %s7, 1
    %s13 = ssub.s32 %s7, 2
    %s20 = sadd.s32 1, %s15
    %p21 = scmp.ge.s32.totalorder %s20, 1
    %s22 = scalar_select %p21, 0, %s20
    %s23 = sadd.s32 1, %s14
    %s24 = scalar_select %p21, %s23, %s14
    %p25 = scmp.ge.s32.totalorder %s24, 2
    %s26 = scalar_select %p25, 0, %s24
    %s27 = sadd.s32 %s14, %s15
    %p28 = scmp.lt.s32.totalorder %s27, 0
    %s29 = scalar_select %p28, %s27, 0
    %s30 = sadd.s32 %s26, %s22
    %p31 = scmp.lt.s32.totalorder %s30, 0
    %s32 = scalar_select %p31, %s30, 0
    %s33 = ssub.s32 %s29, %s32
    %p34 = scmp.eq.s32.totalorder %s33, 0
    %s36 = sadd.s32 %s35, 1
    %s37 = scalar_select %p34, %s35, %s36
    %p40 = pneg %p34
    %p41 = scmp.eq.s32.totalorder %s7, 1
    %p42 = por %p40, %p41
    %p43 = scmp.ne.s32.totalorder %s35, %s38
    %p44 = scmp.eq.s32.totalorder %s7, 0
    %p45 = por %p43, %p44
    %p46 = scmp.ne.s32.totalorder %s35, %s38
    %p47 = scmp.eq.s32.totalorder %s12, 1
    %p48 = por %p46, %p47
    %p49 = scmp.ne.s32.totalorder %s38, %s39
    %p50 = scmp.eq.s32.totalorder %s12, 0
    %p51 = por %p49, %p50
    %p52 = scmp.ne.s32.totalorder %s38, %s39
    %p53 = scmp.eq.s32.totalorder %s13, 1
    %p54 = por %p52, %p53
    %p56 = scmp.ne.s32.totalorder %s39, %s55
    %p57 = scmp.eq.s32.totalorder %s13, 0
    %p58 = por %p56, %p57
    %s59 = ssub.s32 %s14, %s26
    %p60 = scmp.eq.s32.totalorder %s59, 0
    %s62 = sadd.s32 %s61, 1
    %s63 = scalar_select %p60, %s61, %s62
    %p66 = pneg %p60
    %p67 = scmp.eq.s32.totalorder %s7, 1
    %p68 = por %p66, %p67
    %p69 = scmp.ne.s32.totalorder %s61, %s64
    %p70 = scmp.eq.s32.totalorder %s7, 0
    %p71 = por %p69, %p70
    %p72 = scmp.ne.s32.totalorder %s61, %s64
    %p73 = scmp.eq.s32.totalorder %s12, 1
    %p74 = por %p72, %p73
    %p75 = scmp.ne.s32.totalorder %s64, %s65
    %p76 = scmp.eq.s32.totalorder %s12, 0
    %p77 = por %p75, %p76
    %p78 = scmp.ne.s32.totalorder %s64, %s65
    %p79 = scmp.eq.s32.totalorder %s13, 1
    %p80 = por %p78, %p79
    %p82 = scmp.ne.s32.totalorder %s65, %s81
    %p83 = scmp.eq.s32.totalorder %s13, 0
    %p84 = por %p82, %p83
    %p85 = scmp.le.s32.totalorder 1, %s7
    %p86 = scmp.lt.s32.totalorder %s7, 3
    %p87 = pnand %p85, %p86
    %p88 = pneg %p87
    // Predicated region
    $region9: #{mil_forward.1} parent=5 // pred_check
      _
    $region10: #{mil_forward.1} parent=5 // pred_check_branch
      %90 = sbr.rel (%p87) target = $region12
    $region11: #{mil_forward.1} parent=5 // pred_region
      %s91 = ssub.s32 %s7, 1
    $region12: #{mil_forward.1} parent=5 // pred_fallthru
      _
    %p92 = scmp.lt.s32.totalorder %s7, 2
    // Predicated region
    $region13: #{mil_forward.1} parent=5 // pred_check
      %p93 = pneg %p92
    $region14: #{mil_forward.1} parent=5 // pred_check_branch
      %95 = sbr.rel (%p93) target = $region16
    $region15: #{mil_forward.1} parent=5 // pred_region
      // Predicated region
      $region17: #{mil_forward.1} parent=15 // pred_check
        %p96 = pneg %p45
      $region18: #{mil_forward.1} parent=15 // pred_check_branch
        %98 = sbr.rel (%p96) target = $region20
      $region19: #{mil_forward.1} parent=15 // pred_region
        %s99 = sadd.s32 %s14, %s15
        %p100 = scmp.lt.s32.totalorder %s99, 0
        %s101 = scalar_select %p100, %s99, 0
        %p102 = scmp.lt.s32.totalorder %s101, 0
        %s103 = scalar_select %p102, %s101, 0
        %s104 = smul.addr %s103, 8
        %s105 = scalar_lea.vmem %s0, %s104
        %s106 = sadd.s32 %s14, %s15
        %p107 = scmp.lt.s32.totalorder %s106, 0
        %s108 = scalar_select %p107, %s106, 0
      $region20: #{mil_forward.1} parent=15 // pred_fallthru
        _
    $region16: #{mil_forward.1} parent=5 // pred_fallthru
      _
    %p109 = scmp.le.s32.totalorder 1, %s7
    %p110 = scmp.lt.s32.totalorder %s7, 3
    %p111 = pnand %p109, %p110
    %p112 = pneg %p111
    // Predicated region
    $region21: #{mil_forward.1} parent=5 // pred_check
      _
    $region22: #{mil_forward.1} parent=5 // pred_check_branch
      %114 = sbr.rel (%p111) target = $region24
    $region23: #{mil_forward.1} parent=5 // pred_region
      %s115 = ssub.s32 %s7, 1
      %s116 = sadd.s32 %s16, %s17
      %p117 = scmp.lt.s32.totalorder %s116, 0
      %s118 = scalar_select %p117, %s116, 0
      %p119 = scmp.lt.s32.totalorder %s118, 0
      %s120 = scalar_select %p119, %s118, 0
      %s121 = smul.addr %s120, 8
      %s122 = scalar_lea.vmem %s0, %s121
      %p123 = pneg %p51
      %p124 = pneg %p48
      %p125 = pneg %p77
      %p126 = pneg %p74
      %p127 = scmp.lt.s32.totalorder %s16, 1
      %s128 = scalar_select %p127, %s16, 1
      %s129 = smul.addr %s128, 8
      %s130 = scalar_lea.vmem %s1, %s129
      %s131 = sadd.s32 %s16, %s17
      %p132 = scmp.lt.s32.totalorder %s131, 0
      %s133 = scalar_select %p132, %s131, 0
      %p134 = scmp.lt.s32.totalorder %s133, 0
      %s135 = scalar_select %p134, %s133, 0
      %s136 = smul.addr %s135, 8
      %s137 = scalar_lea.vmem %s0, %s136
      %s138 = sadd.s32 %s16, %s17
      %p139 = scmp.lt.s32.totalorder %s138, 0
      %s140 = scalar_select %p139, %s138, 0
      %p141 = scmp.lt.s32.totalorder %s16, 1
      %s142 = scalar_select %p141, %s16, 1
      %s143 = smul.addr %s142, 8
      %s144 = scalar_lea.vmem %s1, %s143
      %s145 = sadd.s32 %s16, %s17
      %p146 = scmp.eq.s32.totalorder %s17, 0
      // Predicated region
      $region25: #{mil_forward.1} parent=23 // pred_check
        %p147 = pneg %p146
      $region26: #{mil_forward.1} parent=23 // pred_check_branch
        %149 = sbr.rel (%p147) target = $region28
      $region27: #{mil_forward.1} parent=23 // pred_region
        %vm150 = vcmask 1022976
        %151 = vst.msk [vmem:[#allocation2] sm:$0xff] %vm150, 0.0
      $region28: #{mil_forward.1} parent=23 // pred_fallthru
        _
      %p152 = scmp.lt.s32.totalorder %s145, 1
      // Predicated region
      $region29: #{mil_forward.1} parent=23 // pred_check
        %p153 = pneg %p152
      $region30: #{mil_forward.1} parent=23 // pred_check_branch
        %155 = sbr.rel (%p153) target = $region32
      $region31: #{mil_forward.1} parent=23 // pred_region
        %v156 = vld [vmem:[%s137] sm:$0xff]
        %158 = vrot.lane.b32.xlu0 %v156, 125
        %v159 = vpop.permute.xlu0 %158
        %v161 = vsub.f32 %v156, %v159
        %v162 = vand.u32 2147483647, %v161
        %v163 = vld [vmem:[#allocation2] sm:$0xff]
        %v164 = vadd.f32 %v163, %v162
        %vm165 = vcmask 1022976
        %166 = vst.msk [vmem:[#allocation2] sm:$0xff] %vm165, %v164
      $region32: #{mil_forward.1} parent=23 // pred_fallthru
        _
      // Predicated region
      $region33: #{mil_forward.1} parent=23 // pred_check
        %p167 = pneg %p146
      $region34: #{mil_forward.1} parent=23 // pred_check_branch
        %169 = sbr.rel (%p167) target = $region36
      $region35: #{mil_forward.1} parent=23 // pred_region
        %v170 = vlaneseq
        %v171 = vand.u32 %v170, 127
        %v172 = vand.u32 %v171, 3
        %vm173 = vcmp.eq.s32.totalorder %v172, 0
        %v174 = vld [vmem:[#allocation2] sm:$0xff]
        %v175 = vsel %vm173, %v174, 0.0
        %vm176 = vcmask 1022976
        %v177 = vsel %vm176, %v175, 0.0
        %178 = vadd.xlane.f32.xlu0 %v177
        %v179 = vpop.xlane.xlu0 %178
        %v180 = vrot.slane %v179, 4
        %v181 = vadd.f32 %v179, %v180
        %v182 = vrot.slane %v181, 2
        %v183 = vadd.f32 %v181, %v182
        %v184 = vrot.slane %v183, 1
        %v185 = vadd.f32 %v183, %v184
        %s186 = vtos %v185
        %s187 = smul.f32 %s186, 0.00390625
        %v188 = vstv %s187
        %189 = vst [vmem:[%s144] sm:$0xff] %v188
      $region36: #{mil_forward.1} parent=23 // pred_fallthru
        _
      %p190 = scmp.lt.s32.totalorder %s16, 1
      %s191 = scalar_select %p190, %s16, 1
      %s192 = smul.addr %s191, 8
      %s193 = scalar_lea.vmem %s1, %s192
      // Predicated region
      $region37: #{mil_forward.1} parent=23 // pred_check
        %p194 = pneg %p74
      $region38: #{mil_forward.1} parent=23 // pred_check_branch
        %196 = sbr.rel (%p194) target = $region40
      $region39: #{mil_forward.1} parent=23 // pred_region
        _
      $region40: #{mil_forward.1} parent=23 // pred_fallthru
        _
    $region24: #{mil_forward.1} parent=5 // pred_fallthru
      _
    %p197 = scmp.le.s32.totalorder 2, %s7
    // Predicated region
    $region41: #{mil_forward.1} parent=5 // pred_check
      %p198 = pneg %p197
    $region42: #{mil_forward.1} parent=5 // pred_check_branch
      %200 = sbr.rel (%p198) target = $region44
    $region43: #{mil_forward.1} parent=5 // pred_region
      %s201 = ssub.s32 %s7, 2
      // Predicated region
      $region45: #{mil_forward.1} parent=43 // pred_check
        %p202 = pneg %p80
      $region46: #{mil_forward.1} parent=43 // pred_check_branch
        %204 = sbr.rel (%p202) target = $region48
      $region47: #{mil_forward.1} parent=43 // pred_region
        %p205 = scmp.lt.s32.totalorder %s18, 1
        %s206 = scalar_select %p205, %s18, 1
        %s207 = smul.addr %s206, 8
        %s208 = scalar_lea.vmem %s1, %s207
      $region48: #{mil_forward.1} parent=43 // pred_fallthru
        _
    $region44: #{mil_forward.1} parent=5 // pred_fallthru
      _
  $region6: #{mil_forward.1} parent=0 // loop_footer
    %s11 = sadd.s32 1, %s7
  $region7: #{mil_forward.1} parent=0 // loop_footer_branch
    %6 = sbr.rel target = $region3
  $region8: #{mil_forward.1} parent=0 // loop_exit
    _

</llo_original>
